<compile_context>
chip_gen: v7x
topology: tpu7x:2x2x1
jax: 0.10.0
libtpu: 0.0.40
codegen_flags: <defaults>
</compile_context>

<pallas_src>
import functools
import math

import jax
import jax.numpy as jnp
from jax.experimental import pallas as pl
from jax.experimental.pallas import tpu as pltpu

BN_EPS = 1e-5
NEGATIVE_SLOPE = 0.2


def _num_tensorcores():
    """Heuristic TC count per chip (2 on v7x-class parts, else 1)."""
    try:
        kind = jax.devices()[0].device_kind.lower()
        return 2 if "7" in kind else 1
    except Exception:
        return 1


def _vmem_limit_bytes():
    """Generation-gated scoped-VMEM request (v5e/v6e: 128 MiB phys, v7x: 64)."""
    cap = 64 * 1024 * 1024  # conservative fallback (v7x physical)
    try:
        cap = int(pltpu.get_tpu_info().vmem_capacity_bytes)
    except Exception:
        pass
    limit = max(32 * 1024 * 1024, min(3 * cap // 4, 100 * 1024 * 1024))
    if _num_tensorcores() >= 2:  # v7x: 64 MiB physical per TensorCore
        limit = min(limit, 48 * 1024 * 1024)
    return limit


def _pick_tile_m(n, vmem_limit):
    """Destination-row tile: VMEM-budgeted, multiple of 32, divides n."""
    budget = vmem_limit // 2  # headroom for grid-invariant h/sdot residents
    # Per destination row x N source cols of live tile data (double-buffered
    # int8 adjacency + f32 adj/exp/p intermediates + bf16 p) plus ~4 KiB of
    # lane-padded narrow per-row slabs.
    per_row = 18 * max(n, 1) + 4096
    tm = budget // per_row
    tm = int(max(32, min(1024, (tm // 32) * 32)))
    tm = min(tm, n)
    while tm >= 32 and n % tm:
        tm -= 32
    if tm < 32 or n % tm:
        tm = n  # single full-height tile (full-dim block is always legal)
    # v7x: prefer an even tile count so the ("parallel",) axis load-balances
    # across the two TensorCores.
    if n % tm == 0 and _num_tensorcores() >= 2:
        if (n // tm) % 2 == 1 and tm % 64 == 0:
            tm //= 2
    return tm


def _gat_agg_kernel(adjt_ref, h_ref, sdot_ref, sdmax_ref, dst_ref, out_ref, *,
                    n_head, d_head, average_heads, include_top):
    # int8 0/1 adjacency converted to f32 ONCE per tile, reused by every head.
    adj_f = adjt_ref[...].astype(jnp.float32)              # (TM, N) [dst, src]
    bn_scale = 1.0 / math.sqrt(1.0 + BN_EPS)               # BatchNorm1d eval

    def head_attention(hd):
        dd = dst_ref[:, hd:hd + 1]                         # (TM, 1) dot_dst
        sd = sdot_ref[hd:hd + 1, :]                        # (1, N)  dot_src
        logit = dd + sd                                    # (TM, N)
        leaky = jnp.maximum(logit, NEGATIVE_SLOPE * logit)
        # Analytic shift: leaky-ReLU is monotone increasing, so
        #   max_u leaky(dd + sd[u]) == leaky(dd + max_u sd[u])
        # -> no (TM, N) cross-lane reduction for the softmax max.
        t = dd + sdmax_ref[:, hd:hd + 1]                   # (TM, 1)
        shift = jnp.maximum(t, NEGATIVE_SLOPE * t)
        p = jnp.exp(leaky - shift) * adj_f                 # (TM, N) masked exp
        # One bf16 MXU matmul yields numerator AND denominator (trailing ones
        # column in h_heads) -> no (TM, N) sum reduction, and both use the
        # same bf16-rounded p.
        acc = jnp.dot(p.astype(jnp.bfloat16), h_ref[hd],
                      preferred_element_type=jnp.float32)  # (TM, D+1)
        denom = jnp.maximum(acc[:, d_head:], 1e-30)        # rows w/o in-edges -> 0 out
        return acc[:, :d_head] / denom

    heads = [head_attention(hd) for hd in range(n_head)]
    if average_heads:
        acc = heads[0]
        for extra in heads[1:]:
            acc = acc + extra
        out = acc * (1.0 / n_head)
    else:
        out = heads[0] if n_head == 1 else jnp.concatenate(heads, axis=1)
    out = out + dst_ref[:, n_head:]                        # skip (+ folded bias)
    if include_top:
        out = jnp.maximum(out * bn_scale, 0.0)             # BN(eval)+ReLU; Dropout=id
    out_ref[...] = out.astype(out_ref.dtype)               # single full-block store


def gatconv_layer(x, adjt_i8, params, *, n_head, d_head, average_heads,
                  include_top, include_bias):
    n, _ = x.shape
    hd_total = n_head * d_head
    out_dim = d_head if average_heads else hd_total
    vmem_limit = _vmem_limit_bytes()
    tm = _pick_tile_m(n, vmem_limit)
    grid = (pl.cdiv(n, tm),)

    # ---- Tiny projections in plain XLA (K = d_in <= 16 starves the MXU and a
    # packed f32 "pre" slab would round-trip HBM for nothing).
    h = x @ params["w_embed"]                              # (N, H*D) f32
    h3 = h.reshape(n, n_head, d_head)
    dot_src = jnp.einsum("nhd,hd->nh", h3, params["a_src"])   # (N, H)
    dot_dst = jnp.einsum("nhd,hd->nh", h3, params["a_dst"])   # (N, H)
    skip = x @ params["w_lin"]                                # (N, out_dim)
    if include_bias and not include_top:
        skip = skip + params["bias"]   # no ReLU in between -> fold bias here

    # Per-head features with a trailing ones column; bf16 (MXU operand only).
    ones = jnp.ones((n_head, n, 1), h.dtype)
    h_heads = jnp.concatenate([jnp.transpose(h3, (1, 0, 2)), ones], axis=2)
    h_heads = h_heads.astype(jnp.bfloat16)                    # (H, N, D+1)

    sdot_rows = dot_src.T                                     # (H, N) lane-broadcast
    sdmax = jnp.max(dot_src, axis=0).reshape(1, n_head)       # analytic-shift input
    dst_slab = jnp.concatenate([dot_dst, skip], axis=1)       # (N, H + out_dim)

    kernel = functools.partial(
        _gat_agg_kernel, n_head=n_head, d_head=d_head,
        average_heads=average_heads, include_top=include_top)

    out = pl.pallas_call(
        kernel,
        out_shape=jax.ShapeDtypeStruct((n, out_dim), jnp.float32),
        grid=grid,
        in_specs=[
            pl.BlockSpec((tm, n), lambda i: (i, 0)),                    # adj_t int8
            pl.BlockSpec((n_head, n, d_head + 1), lambda i: (0, 0, 0)),  # h (+1s) bf16
            pl.BlockSpec((n_head, n), lambda i: (0, 0)),                # dot_src rows
            pl.BlockSpec((1, n_head), lambda i: (0, 0)),                # per-head max
            pl.BlockSpec((tm, n_head + out_dim), lambda i: (i, 0)),     # [ddot|skip]
        ],
        out_specs=pl.BlockSpec((tm, out_dim), lambda i: (i, 0)),
        compiler_params=pltpu.CompilerParams(
            dimension_semantics=("parallel",),
            vmem_limit_bytes=vmem_limit),
    )(adjt_i8, h_heads, sdot_rows, sdmax, dst_slab)

    if include_bias and include_top:
        # Latent config (never hit by GAT.__init__): bias added after ReLU,
        # matching the reference ordering.
        out = out + params["bias"]
    return out


def _xavier_normal(key, shape, fan_in, fan_out, gain):
    std = gain * math.sqrt(2.0 / (fan_in + fan_out))
    return std * jax.random.normal(key, shape, jnp.float32)


def init_gatconv_params(key, d_in, d_head, n_head, average_heads):
    gain = math.sqrt(2.0)  # nn.init.calculate_gain('relu')
    k1, k2, k3, k4 = jax.random.split(key, 4)
    out_embed = d_head * n_head
    # torch Linear weight is (out, in); store transposed for x @ W
    w_embed = _xavier_normal(k1, (d_in, out_embed), d_in, out_embed, gain)
    # a_src / a_dst torch shape (1, n_head, d_head): fan_in = H*D, fan_out = D
    a_src = _xavier_normal(k2, (n_head, d_head), n_head * d_head, d_head, gain)
    a_dst = _xavier_normal(k3, (n_head, d_head), n_head * d_head, d_head, gain)
    out_lin = d_head if average_heads else d_head * n_head
    w_lin = _xavier_normal(k4, (d_in, out_lin), d_in, out_lin, gain)
    bias = jnp.zeros((1, out_lin), jnp.float32)  # zeros (matches reset_parameters)
    return dict(w_embed=w_embed, a_src=a_src, a_dst=a_dst, w_lin=w_lin, bias=bias)


def gat_forward(x, adj_t, layer_params, layer_cfgs):
    # Convert the adjacency once (exact 0/1 in int8) and share it across all
    # layers; int8 halves/quarters the dominant N^2 HBM stream.
    adjt_i8 = (adj_t != 0).astype(jnp.int8)
    h = x  # input dropout = identity (eval)
    for params, cfg in zip(layer_params, layer_cfgs):
        h = gatconv_layer(h, adjt_i8, params, **cfg)
    return h


if __name__ == "__main__":
    # GAT(d_input=16, n_class=4, d_head=8, n_layer=3, n_head=2, masked=False)
    d_input, n_class, d_head, n_layer, n_head = 16, 4, 8, 3, 2
    N = 8  # number of graph nodes

    key = jax.random.PRNGKey(0)
    kx, kadj, kp = jax.random.split(key, 3)

    x = jax.random.normal(kx, (N, d_input), jnp.float32)

    # Random directed graph; self-loops guarantee every node has >=1 in-edge.
    adj = (jax.random.uniform(kadj, (N, N)) < 0.4).astype(jnp.float32)
    adj = jnp.maximum(adj, jnp.eye(N, dtype=jnp.float32))   # adj[u, v]: edge u -> v
    adj_t = adj.T                                           # kernel layout [dst, src]

    # Layer configs exactly as GAT.__init__ builds them.
    cfgs = [dict(n_head=n_head, d_head=d_head, average_heads=False,
                 include_top=True, include_bias=False)]
    cfgs += [dict(n_head=n_head, d_head=d_head, average_heads=False,
                  include_top=True, include_bias=False)
             for _ in range(n_layer - 2)]
    cfgs += [dict(n_head=1, d_head=n_class, average_heads=True,
                  include_top=False, include_bias=True)]

    d_ins = [d_input] + [d_head * n_head] * (n_layer - 1)
    keys = jax.random.split(kp, n_layer)
    layer_params = [
        init_gatconv_params(keys[i], d_ins[i], cfgs[i]["d_head"],
                            cfgs[i]["n_head"], cfgs[i]["average_heads"])
        for i in range(n_layer)
    ]

    forward = jax.jit(lambda xx, aa: gat_forward(xx, aa, layer_params, cfgs))
    out = forward(x, adj_t)
    out = jax.block_until_ready(out)
    assert out.shape == (N, n_class), out.shape
    assert bool(jnp.all(jnp.isfinite(out)))
    print("KERNEL_OK")
</pallas_src>

<mosaic_0001>
module attributes {stable_mosaic.version = 11 : i64} {
  func.func @_gat_agg_kernel(%arg0: i32, %arg1: memref<8x8xi8, #tpu.memory_space<vmem>>, %arg2: memref<2x8x9xbf16, #tpu.memory_space<vmem>>, %arg3: memref<2x8xf32, #tpu.memory_space<vmem>>, %arg4: memref<1x2xf32, #tpu.memory_space<vmem>>, %arg5: memref<8x18xf32, #tpu.memory_space<vmem>>, %arg6: memref<8x16xf32, #tpu.memory_space<vmem>>) attributes {dimension_semantics = [#tpu.dimension_semantics<parallel>], iteration_bounds = array<i64: 1>, scalar_prefetch = 0 : i64, scratch_operands = 0 : i64, tpu.core_type = #tpu.core_type<tc>, window_params = [{transform_indices = @transform_0, window_bounds = array<i64: 8, 8>}, {pipeline_mode = #tpu.pipeline_mode<synchronous>, transform_indices = @transform_1, window_bounds = array<i64: 2, 8, 9>}, {pipeline_mode = #tpu.pipeline_mode<synchronous>, transform_indices = @transform_2, window_bounds = array<i64: 2, 8>}, {pipeline_mode = #tpu.pipeline_mode<synchronous>, transform_indices = @transform_3, window_bounds = array<i64: 1, 2>}, {transform_indices = @transform_4, window_bounds = array<i64: 8, 18>}, {transform_indices = @transform_5, window_bounds = array<i64: 8, 16>}]} {
    %c0 = arith.constant 0 : index
    %c0_0 = arith.constant 0 : index
    %0 = vector.load %arg1[%c0, %c0_0] : memref<8x8xi8, #tpu.memory_space<vmem>>, vector<8x8xi8>
    %1 = arith.sitofp %0 : vector<8x8xi8> to vector<8x8xf32>
    %c0_1 = arith.constant 0 : index
    %c0_2 = arith.constant 0 : index
    %2 = vector.load %arg5[%c0_1, %c0_2] : memref<8x18xf32, #tpu.memory_space<vmem>>, vector<8x1xf32>
    %c0_3 = arith.constant 0 : index
    %c0_4 = arith.constant 0 : index
    %3 = vector.load %arg3[%c0_3, %c0_4] : memref<2x8xf32, #tpu.memory_space<vmem>>, vector<1x8xf32>
    %4 = vector.broadcast %2 : vector<8x1xf32> to vector<8x8xf32>
    %5 = vector.broadcast %3 : vector<1x8xf32> to vector<8x8xf32>
    %6 = arith.addf %4, %5 : vector<8x8xf32>
    %cst = arith.constant 2.000000e-01 : f32
    %7 = vector.broadcast %cst : f32 to vector<8x8xf32>
    %8 = arith.mulf %7, %6 : vector<8x8xf32>
    %9 = arith.maximumf %6, %8 : vector<8x8xf32>
    %c0_5 = arith.constant 0 : index
    %c0_6 = arith.constant 0 : index
    %10 = vector.load %arg4[%c0_5, %c0_6] : memref<1x2xf32, #tpu.memory_space<vmem>>, vector<1x1xf32>
    %11 = vector.broadcast %10 : vector<1x1xf32> to vector<8x1xf32>
    %12 = arith.addf %2, %11 : vector<8x1xf32>
    %cst_7 = arith.constant 2.000000e-01 : f32
    %13 = vector.broadcast %cst_7 : f32 to vector<8x1xf32>
    %14 = arith.mulf %13, %12 : vector<8x1xf32>
    %15 = arith.maximumf %12, %14 : vector<8x1xf32>
    %16 = vector.broadcast %15 : vector<8x1xf32> to vector<8x8xf32>
    %17 = arith.subf %9, %16 : vector<8x8xf32>
    %18 = math.exp %17 : vector<8x8xf32>
    %19 = arith.mulf %18, %1 : vector<8x8xf32>
    %20 = arith.truncf %19 : vector<8x8xf32> to vector<8x8xbf16>
    %c0_8 = arith.constant 0 : index
    %c0_9 = arith.constant 0 : index
    %c0_10 = arith.constant 0 : index
    %21 = vector.load %arg2[%c0_8, %c0_9, %c0_10] : memref<2x8x9xbf16, #tpu.memory_space<vmem>>, vector<1x8x9xbf16>
    %22 = vector.shape_cast %21 : vector<1x8x9xbf16> to vector<8x9xbf16>
    %cst_11 = arith.constant dense<0.000000e+00> : vector<8x9xf32>
    %23 = tpu.matmul %20, %22, %cst_11 {dimension_numbers = #tpu.dot_dimension_numbers<[1], [0], [0], [1], [0, 0, 1, 1], [], []>} : vector<8x8xbf16>, vector<8x9xbf16>, vector<8x9xf32> -> vector<8x9xf32>
    %24 = vector.extract_strided_slice %23 {offsets = [0, 8], sizes = [8, 1], strides = [1, 1]} : vector<8x9xf32> to vector<8x1xf32>
    %cst_12 = arith.constant 1.000000e-30 : f32
    %25 = vector.broadcast %cst_12 : f32 to vector<8x1xf32>
    %26 = arith.maximumf %24, %25 : vector<8x1xf32>
    %27 = vector.extract_strided_slice %23 {offsets = [0, 0], sizes = [8, 8], strides = [1, 1]} : vector<8x9xf32> to vector<8x8xf32>
    %28 = vector.broadcast %26 : vector<8x1xf32> to vector<8x8xf32>
    %29 = arith.divf %27, %28 : vector<8x8xf32>
    %c0_13 = arith.constant 0 : index
    %c1 = arith.constant 1 : index
    %30 = vector.load %arg5[%c0_13, %c1] : memref<8x18xf32, #tpu.memory_space<vmem>>, vector<8x1xf32>
    %c1_14 = arith.constant 1 : index
    %c0_15 = arith.constant 0 : index
    %31 = vector.load %arg3[%c1_14, %c0_15] : memref<2x8xf32, #tpu.memory_space<vmem>>, vector<1x8xf32>
    %32 = vector.broadcast %30 : vector<8x1xf32> to vector<8x8xf32>
    %33 = vector.broadcast %31 : vector<1x8xf32> to vector<8x8xf32>
    %34 = arith.addf %32, %33 : vector<8x8xf32>
    %cst_16 = arith.constant 2.000000e-01 : f32
    %35 = vector.broadcast %cst_16 : f32 to vector<8x8xf32>
    %36 = arith.mulf %35, %34 : vector<8x8xf32>
    %37 = arith.maximumf %34, %36 : vector<8x8xf32>
    %c0_17 = arith.constant 0 : index
    %c1_18 = arith.constant 1 : index
    %38 = vector.load %arg4[%c0_17, %c1_18] : memref<1x2xf32, #tpu.memory_space<vmem>>, vector<1x1xf32>
    %39 = vector.broadcast %38 : vector<1x1xf32> to vector<8x1xf32>
    %40 = arith.addf %30, %39 : vector<8x1xf32>
    %cst_19 = arith.constant 2.000000e-01 : f32
    %41 = vector.broadcast %cst_19 : f32 to vector<8x1xf32>
    %42 = arith.mulf %41, %40 : vector<8x1xf32>
    %43 = arith.maximumf %40, %42 : vector<8x1xf32>
    %44 = vector.broadcast %43 : vector<8x1xf32> to vector<8x8xf32>
    %45 = arith.subf %37, %44 : vector<8x8xf32>
    %46 = math.exp %45 : vector<8x8xf32>
    %47 = arith.mulf %46, %1 : vector<8x8xf32>
    %48 = arith.truncf %47 : vector<8x8xf32> to vector<8x8xbf16>
    %c1_20 = arith.constant 1 : index
    %c0_21 = arith.constant 0 : index
    %c0_22 = arith.constant 0 : index
    %49 = vector.load %arg2[%c1_20, %c0_21, %c0_22] : memref<2x8x9xbf16, #tpu.memory_space<vmem>>, vector<1x8x9xbf16>
    %50 = vector.shape_cast %49 : vector<1x8x9xbf16> to vector<8x9xbf16>
    %cst_23 = arith.constant dense<0.000000e+00> : vector<8x9xf32>
    %51 = tpu.matmul %48, %50, %cst_23 {dimension_numbers = #tpu.dot_dimension_numbers<[1], [0], [0], [1], [0, 0, 1, 1], [], []>} : vector<8x8xbf16>, vector<8x9xbf16>, vector<8x9xf32> -> vector<8x9xf32>
    %52 = vector.extract_strided_slice %51 {offsets = [0, 8], sizes = [8, 1], strides = [1, 1]} : vector<8x9xf32> to vector<8x1xf32>
    %cst_24 = arith.constant 1.000000e-30 : f32
    %53 = vector.broadcast %cst_24 : f32 to vector<8x1xf32>
    %54 = arith.maximumf %52, %53 : vector<8x1xf32>
    %55 = vector.extract_strided_slice %51 {offsets = [0, 0], sizes = [8, 8], strides = [1, 1]} : vector<8x9xf32> to vector<8x8xf32>
    %56 = vector.broadcast %54 : vector<8x1xf32> to vector<8x8xf32>
    %57 = arith.divf %55, %56 : vector<8x8xf32>
    %58 = tpu.concatenate %29, %57 in 1 : vector<8x8xf32>, vector<8x8xf32> -> vector<8x16xf32>
    %c0_25 = arith.constant 0 : index
    %c2 = arith.constant 2 : index
    %59 = vector.load %arg5[%c0_25, %c2] : memref<8x18xf32, #tpu.memory_space<vmem>>, vector<8x16xf32>
    %60 = arith.addf %58, %59 : vector<8x16xf32>
    %cst_26 = arith.constant 0.999994993 : f32
    %61 = vector.broadcast %cst_26 : f32 to vector<8x16xf32>
    %62 = arith.mulf %60, %61 : vector<8x16xf32>
    %cst_27 = arith.constant 0.000000e+00 : f32
    %63 = vector.broadcast %cst_27 : f32 to vector<8x16xf32>
    %64 = arith.maximumf %62, %63 : vector<8x16xf32>
    %c0_28 = arith.constant 0 : index
    %c0_29 = arith.constant 0 : index
    %65 = vector.load %arg6[%c0_28, %c0_29] : memref<8x16xf32, #tpu.memory_space<vmem>>, vector<8x16xf32>
    tpu.vector_store %arg6[%c0_28, %c0_29], %64 {strides = array<i32>} : memref<8x16xf32, #tpu.memory_space<vmem>>, vector<8x16xf32>,
    return
  }
  func.func @transform_0(%arg0: i32) -> (i32, i32) {
    %c0_i32 = arith.constant 0 : i32
    %c0_i32_0 = arith.constant 0 : i32
    return %arg0, %c0_i32 : i32, i32
  }
  func.func @transform_1(%arg0: i32) -> (i32, i32, i32) {
    %c0_i32 = arith.constant 0 : i32
    %c0_i32_0 = arith.constant 0 : i32
    %c0_i32_1 = arith.constant 0 : i32
    %c0_i32_2 = arith.constant 0 : i32
    return %c0_i32, %c0_i32_0, %c0_i32_1 : i32, i32, i32
  }
  func.func @transform_2(%arg0: i32) -> (i32, i32) {
    %c0_i32 = arith.constant 0 : i32
    %c0_i32_0 = arith.constant 0 : i32
    %c0_i32_1 = arith.constant 0 : i32
    return %c0_i32, %c0_i32_0 : i32, i32
  }
  func.func @transform_3(%arg0: i32) -> (i32, i32) {
    %c0_i32 = arith.constant 0 : i32
    %c0_i32_0 = arith.constant 0 : i32
    %c0_i32_1 = arith.constant 0 : i32
    return %c0_i32, %c0_i32_0 : i32, i32
  }
  func.func @transform_4(%arg0: i32) -> (i32, i32) {
    %c0_i32 = arith.constant 0 : i32
    %c0_i32_0 = arith.constant 0 : i32
    return %arg0, %c0_i32 : i32, i32
  }
  func.func @transform_5(%arg0: i32) -> (i32, i32) {
    %c0_i32 = arith.constant 0 : i32
    %c0_i32_0 = arith.constant 0 : i32
    return %arg0, %c0_i32 : i32, i32
  }
}

module attributes {stable_mosaic.version = 11 : i64} {
  func.func @_gat_agg_kernel(%arg0: i32, %arg1: memref<8x8xi8, #tpu.memory_space<vmem>>, %arg2: memref<1x8x5xbf16, #tpu.memory_space<vmem>>, %arg3: memref<1x8xf32, #tpu.memory_space<vmem>>, %arg4: memref<1x1xf32, #tpu.memory_space<vmem>>, %arg5: memref<8x5xf32, #tpu.memory_space<vmem>>, %arg6: memref<8x4xf32, #tpu.memory_space<vmem>>) attributes {dimension_semantics = [#tpu.dimension_semantics<parallel>], iteration_bounds = array<i64: 1>, scalar_prefetch = 0 : i64, scratch_operands = 0 : i64, tpu.core_type = #tpu.core_type<tc>, window_params = [{transform_indices = @transform_0, window_bounds = array<i64: 8, 8>}, {pipeline_mode = #tpu.pipeline_mode<synchronous>, transform_indices = @transform_1, window_bounds = array<i64: 1, 8, 5>}, {pipeline_mode = #tpu.pipeline_mode<synchronous>, transform_indices = @transform_2, window_bounds = array<i64: 1, 8>}, {pipeline_mode = #tpu.pipeline_mode<synchronous>, transform_indices = @transform_3, window_bounds = array<i64: 1, 1>}, {transform_indices = @transform_4, window_bounds = array<i64: 8, 5>}, {transform_indices = @transform_5, window_bounds = array<i64: 8, 4>}]} {
    %c0 = arith.constant 0 : index
    %c0_0 = arith.constant 0 : index
    %0 = vector.load %arg1[%c0, %c0_0] : memref<8x8xi8, #tpu.memory_space<vmem>>, vector<8x8xi8>
    %1 = arith.sitofp %0 : vector<8x8xi8> to vector<8x8xf32>
    %c0_1 = arith.constant 0 : index
    %c0_2 = arith.constant 0 : index
    %2 = vector.load %arg5[%c0_1, %c0_2] : memref<8x5xf32, #tpu.memory_space<vmem>>, vector<8x1xf32>
    %c0_3 = arith.constant 0 : index
    %c0_4 = arith.constant 0 : index
    %3 = vector.load %arg3[%c0_3, %c0_4] : memref<1x8xf32, #tpu.memory_space<vmem>>, vector<1x8xf32>
    %4 = vector.broadcast %2 : vector<8x1xf32> to vector<8x8xf32>
    %5 = vector.broadcast %3 : vector<1x8xf32> to vector<8x8xf32>
    %6 = arith.addf %4, %5 : vector<8x8xf32>
    %cst = arith.constant 2.000000e-01 : f32
    %7 = vector.broadcast %cst : f32 to vector<8x8xf32>
    %8 = arith.mulf %7, %6 : vector<8x8xf32>
    %9 = arith.maximumf %6, %8 : vector<8x8xf32>
    %c0_5 = arith.constant 0 : index
    %c0_6 = arith.constant 0 : index
    %10 = vector.load %arg4[%c0_5, %c0_6] : memref<1x1xf32, #tpu.memory_space<vmem>>, vector<1x1xf32>
    %11 = vector.broadcast %10 : vector<1x1xf32> to vector<8x1xf32>
    %12 = arith.addf %2, %11 : vector<8x1xf32>
    %cst_7 = arith.constant 2.000000e-01 : f32
    %13 = vector.broadcast %cst_7 : f32 to vector<8x1xf32>
    %14 = arith.mulf %13, %12 : vector<8x1xf32>
    %15 = arith.maximumf %12, %14 : vector<8x1xf32>
    %16 = vector.broadcast %15 : vector<8x1xf32> to vector<8x8xf32>
    %17 = arith.subf %9, %16 : vector<8x8xf32>
    %18 = math.exp %17 : vector<8x8xf32>
    %19 = arith.mulf %18, %1 : vector<8x8xf32>
    %20 = arith.truncf %19 : vector<8x8xf32> to vector<8x8xbf16>
    %c0_8 = arith.constant 0 : index
    %c0_9 = arith.constant 0 : index
    %c0_10 = arith.constant 0 : index
    %21 = vector.load %arg2[%c0_8, %c0_9, %c0_10] : memref<1x8x5xbf16, #tpu.memory_space<vmem>>, vector<1x8x5xbf16>
    %22 = vector.shape_cast %21 : vector<1x8x5xbf16> to vector<8x5xbf16>
    %cst_11 = arith.constant dense<0.000000e+00> : vector<8x5xf32>
    %23 = tpu.matmul %20, %22, %cst_11 {dimension_numbers = #tpu.dot_dimension_numbers<[1], [0], [0], [1], [0, 0, 1, 1], [], []>} : vector<8x8xbf16>, vector<8x5xbf16>, vector<8x5xf32> -> vector<8x5xf32>
    %24 = vector.extract_strided_slice %23 {offsets = [0, 4], sizes = [8, 1], strides = [1, 1]} : vector<8x5xf32> to vector<8x1xf32>
    %cst_12 = arith.constant 1.000000e-30 : f32
    %25 = vector.broadcast %cst_12 : f32 to vector<8x1xf32>
    %26 = arith.maximumf %24, %25 : vector<8x1xf32>
    %27 = vector.extract_strided_slice %23 {offsets = [0, 0], sizes = [8, 4], strides = [1, 1]} : vector<8x5xf32> to vector<8x4xf32>
    %28 = vector.broadcast %26 : vector<8x1xf32> to vector<8x4xf32>
    %29 = arith.divf %27, %28 : vector<8x4xf32>
    %cst_13 = arith.constant 1.000000e+00 : f32
    %30 = vector.broadcast %cst_13 : f32 to vector<8x4xf32>
    %31 = arith.mulf %29, %30 : vector<8x4xf32>
    %c0_14 = arith.constant 0 : index
    %c1 = arith.constant 1 : index
    %32 = vector.load %arg5[%c0_14, %c1] : memref<8x5xf32, #tpu.memory_space<vmem>>, vector<8x4xf32>
    %33 = arith.addf %31, %32 : vector<8x4xf32>
    %c0_15 = arith.constant 0 : index
    %c0_16 = arith.constant 0 : index
    %34 = vector.load %arg6[%c0_15, %c0_16] : memref<8x4xf32, #tpu.memory_space<vmem>>, vector<8x4xf32>
    tpu.vector_store %arg6[%c0_15, %c0_16], %33 {strides = array<i32>} : memref<8x4xf32, #tpu.memory_space<vmem>>, vector<8x4xf32>,
    return
  }
  func.func @transform_0(%arg0: i32) -> (i32, i32) {
    %c0_i32 = arith.constant 0 : i32
    %c0_i32_0 = arith.constant 0 : i32
    return %arg0, %c0_i32 : i32, i32
  }
  func.func @transform_1(%arg0: i32) -> (i32, i32, i32) {
    %c0_i32 = arith.constant 0 : i32
    %c0_i32_0 = arith.constant 0 : i32
    %c0_i32_1 = arith.constant 0 : i32
    %c0_i32_2 = arith.constant 0 : i32
    return %c0_i32, %c0_i32_0, %c0_i32_1 : i32, i32, i32
  }
  func.func @transform_2(%arg0: i32) -> (i32, i32) {
    %c0_i32 = arith.constant 0 : i32
    %c0_i32_0 = arith.constant 0 : i32
    %c0_i32_1 = arith.constant 0 : i32
    return %c0_i32, %c0_i32_0 : i32, i32
  }
  func.func @transform_3(%arg0: i32) -> (i32, i32) {
    %c0_i32 = arith.constant 0 : i32
    %c0_i32_0 = arith.constant 0 : i32
    %c0_i32_1 = arith.constant 0 : i32
    return %c0_i32, %c0_i32_0 : i32, i32
  }
  func.func @transform_4(%arg0: i32) -> (i32, i32) {
    %c0_i32 = arith.constant 0 : i32
    %c0_i32_0 = arith.constant 0 : i32
    return %arg0, %c0_i32 : i32, i32
  }
  func.func @transform_5(%arg0: i32) -> (i32, i32) {
    %c0_i32 = arith.constant 0 : i32
    %c0_i32_0 = arith.constant 0 : i32
    return %arg0, %c0_i32 : i32, i32
  }
}

</mosaic_0001>

<llo_original>
// kernel: _lambda_.5
$region0: #{_lambda_.5}
  #allocation0 [shape = 'u32[]', space=smem, size = 0x4, offset = 0x4, fixed_abs, tag = 'smem constant byte address 0x4 - core index']
  #allocation1 [shape = 'u32[144,128]{1,0:T(1,128)}', space=vmem, size = 0x12000, scoped, tag = 'internal scratch']
  #allocation2 [shape = 'f32[1,1]{1,0:T(1,128)S(1)}', space=vmem, size = 0x200, scoped, tag = 'scoped memory for _lambda_.5']
  %s0 = inlined_call_operand.vmem [shape: s8[8,8], index: 0, kind: input, shape index: {}]
  %s1 = inlined_call_operand.vmem [shape: bf16[1,8,5], index: 1, kind: input, shape index: {}]
  %s2 = inlined_call_operand.vmem [shape: f32[1,8], index: 2, kind: input, shape index: {}]
  %s3 = inlined_call_operand.<no memory space> [shape: f32[1,1], index: 3, kind: input, shape index: {}]
  %s4 = inlined_call_operand.vmem [shape: f32[8,5], index: 4, kind: input, shape index: {}]
  %s5 = inlined_call_operand.vmem [shape: f32[8,4], index: 5, kind: output, shape index: {}]
  %s6 = sld [smem:[#allocation0]]
  $region30: #{_lambda_.5} parent=0
    _
  %s8 = ssub.s32 1, %s6
  %s9 = scalar_select 0, %s8, %s6
  %v10 = vstv %s3
  %11 = vst [vmem:[#allocation2] sm:$0x1] %v10
  // Predicated region
  $region2: #{_lambda_.5} parent=0 // pred_check
    _
  $region3: #{_lambda_.5} parent=0 // pred_check_branch
    %13 = sbr.rel (0) target = $region5
  $region4: #{_lambda_.5} parent=0 // pred_region
    _
  $region5: #{_lambda_.5} parent=0 // pred_fallthru
    _
  // Predicated region
  $region6: #{_lambda_.5} parent=0 // pred_check
    _
  $region7: #{_lambda_.5} parent=0 // pred_check_branch
    %15 = sbr.rel (0) target = $region9
  $region8: #{_lambda_.5} parent=0 // pred_region
    _
  $region9: #{_lambda_.5} parent=0 // pred_fallthru
    _
  // Predicated region
  $region10: #{_lambda_.5} parent=0 // pred_check
    _
  $region11: #{_lambda_.5} parent=0 // pred_check_branch
    %17 = sbr.rel (0) target = $region13
  $region12: #{_lambda_.5} parent=0 // pred_region
    _
  $region13: #{_lambda_.5} parent=0 // pred_fallthru
    _
  // Predicated region
  $region14: #{_lambda_.5} parent=0 // pred_check
    _
  $region15: #{_lambda_.5} parent=0 // pred_check_branch
    %19 = sbr.rel (0) target = $region17
  $region16: #{_lambda_.5} parent=0 // pred_region
    _
  $region17: #{_lambda_.5} parent=0 // pred_fallthru
    _
  // Predicated region
  $region18: #{_lambda_.5} parent=0 // pred_check
    _
  $region19: #{_lambda_.5} parent=0 // pred_check_branch
    %21 = sbr.rel (0) target = $region21
  $region20: #{_lambda_.5} parent=0 // pred_region
    _
  $region21: #{_lambda_.5} parent=0 // pred_fallthru
    _
  %v23 = vld [vmem:[%s0] sm:$0x3]
  %v24 = vunpack.c.0.s8 %v23
  %v25 = vcvt.s32.f32 %v24
  %v26 = vld [vmem:[%s4] sm:$0xff]
  %v27 = vld [vmem:[%s2] sm:$0x1]
  %29 = vset.pattern.permute.xlu0 0
  %30 = vperm.xlu0 %29, %v26
  %v31 = vpop.permute.xlu0 %30
  %v34 = vlaneseq
  %v35 = vshrl.u32 %v34, 7
  %v36 = vsub.s32 0, %v35
  %v37 = vrot.slane %v27, %v36
  %v39 = vadd.f32 %v31, %v37
  %v40 = vmul.f32 %v39, 0.2
  %v41 = vmax.f32 %v39, %v40
  %v42 = vld [vmem:[#allocation2] sm:$0x1]
  %v44 = vlaneseq
  %v45 = vshrl.u32 %v44, 7
  %v46 = vsub.s32 0, %v45
  %v47 = vrot.slane %v42, %v46
  %v49 = vadd.f32 %v26, %v47
  %v50 = vmul.f32 %v49, 0.2
  %v51 = vmax.f32 %v49, %v50
  %53 = vset.pattern.permute.xlu0 0
  %54 = vperm.xlu0 %53, %v51
  %v55 = vpop.permute.xlu0 %54
  %v57 = vsub.f32 %v41, %v55
  %v58 = vmul.f32 %v57, 1.442695
  %v59 = vpow.pop %v58
  %v60 = vmul.f32 %v59, %v25
  %v61 = vpack.c.bf16 %v60, %v60
  %v62 = vld [vmem:[%s1] sm:$0xf]
  %vm63 = vcmask 64512
  %v65 = vsel %vm63, %v61, 0
  %vm67 = vcmask 1043456
  %v69 = vsel %vm67, %v62, 0
  %71 = vmatprep.subr.bf16.mxu0 0
  %72 = vmatpush1.bf16.msra.mxu0 %v69
  %73 = vmatprep.subr.bf16.mxu0 0
  %74 = vmatpush1.bf16.msra.mxu0 0
  %75 = vmatprep.subr.bf16.mxu0 0
  %76 = vmatpush1.bf16.msra.mxu0 0
  %77 = vmatprep.subr.bf16.mxu0 0
  %78 = vmatpush1.bf16.msra.mxu0 0
  %79 = vmatprep.subr.bf16.mxu0 0
  %80 = vmatpush1.bf16.msra.mxu0 0
  %81 = vmatprep.subr.bf16.mxu0 0
  %82 = vmatpush1.bf16.msra.mxu0 0
  %83 = vmatprep.subr.bf16.mxu0 0
  %84 = vmatpush1.bf16.msra.mxu0 0
  %85 = vmatprep.subr.bf16.mxu0 0
  %86 = vmatpush1.bf16.msra.mxu0 0
  %87 = vmatprep.subr.bf16.mxu0 0
  %88 = vmatpush1.bf16.msra.mxu0 0
  %89 = vmatprep.subr.bf16.mxu0 0
  %90 = vmatpush1.bf16.msra.mxu0 0
  %91 = vmatprep.subr.bf16.mxu0 0
  %92 = vmatpush1.bf16.msra.mxu0 0
  %93 = vmatprep.subr.bf16.mxu0 0
  %94 = vmatpush1.bf16.msra.mxu0 0
  %95 = vmatprep.subr.bf16.mxu0 0
  %96 = vmatpush1.bf16.msra.mxu0 0
  %97 = vmatprep.subr.bf16.mxu0 0
  %98 = vmatpush1.bf16.msra.mxu0 0
  %99 = vmatprep.subr.bf16.mxu0 0
  %100 = vmatpush1.bf16.msra.mxu0 0
  %101 = vmatprep.subr.bf16.mxu0 0
  %102 = vmatpush1.bf16.msra.mxu0 0
  %103 = vmatprep.mubr.bf16.mxu0 0
  %104 = vmatmul.mubr.bf16.gmra.mrb[0].mxu0 %v65
  %v105 = vpop.f32.mrb[0].mxu0
  %v106 = vadd.f32 0.0, %v105
  %v107 = vpop.f32.mrb[0].mxu0
  %v108 = vpop.f32.mrb[0].mxu0
  %v109 = vpop.f32.mrb[0].mxu0
  %110 = vdwg.mxu0
  %v111 = vmax.f32 %v106, 1e-30
  %113 = vset.pattern.permute.xlu0 4
  %114 = vperm.xlu0 %113, %v111
  %v115 = vpop.permute.xlu0 %114
  %v117 = vrcp.pop %v115
  %v118 = vmul.f32 %v106, %v117
  %119 = vrot.lane.b32.xlu0 %v26, 127
  %v120 = vpop.permute.xlu0 %119
  %v122 = vadd.f32 %v118, %v120
  %vm123 = vcmask 31744
  %124 = vst.msk [vmem:[%s5] sm:$0xff] %vm123, %v122
  // Predicated region
  $region22: #{_lambda_.5} parent=0 // pred_check
    _
  $region23: #{_lambda_.5} parent=0 // pred_check_branch
    %126 = sbr.rel (0) target = $region25
  $region24: #{_lambda_.5} parent=0 // pred_region
    _
  $region25: #{_lambda_.5} parent=0 // pred_fallthru
    _
  // Predicated region
  $region26: #{_lambda_.5} parent=0 // pred_check
    _
  $region27: #{_lambda_.5} parent=0 // pred_check_branch
    %128 = sbr.rel (0) target = $region29
  $region28: #{_lambda_.5} parent=0 // pred_region
    _
  $region29: #{_lambda_.5} parent=0 // pred_fallthru
    _

// kernel: _lambda_.3
$region0: #{_lambda_.3}
  #allocation0 [shape = 'u32[]', space=smem, size = 0x4, offset = 0x4, fixed_abs, tag = 'smem constant byte address 0x4 - core index']
  #allocation1 [shape = 'u32[144,128]{1,0:T(1,128)}', space=vmem, size = 0x12000, scoped, tag = 'internal scratch']
  %s0 = inlined_call_operand.vmem [shape: s8[8,8], index: 0, kind: input, shape index: {}]
  %s1 = inlined_call_operand.vmem [shape: bf16[2,8,9], index: 1, kind: input, shape index: {}]
  %s2 = inlined_call_operand.vmem [shape: f32[2,8], index: 2, kind: input, shape index: {}]
  %s3 = inlined_call_operand.vmem [shape: f32[1,2], index: 3, kind: input, shape index: {}]
  %s4 = inlined_call_operand.vmem [shape: f32[8,18], index: 4, kind: input, shape index: {}]
  %s5 = inlined_call_operand.vmem [shape: f32[8,16], index: 5, kind: output, shape index: {}]
  %s6 = sld [smem:[#allocation0]]
  $region30: #{_lambda_.3} parent=0
    _
  %s8 = ssub.s32 1, %s6
  %s9 = scalar_select 0, %s8, %s6
  // Predicated region
  $region2: #{_lambda_.3} parent=0 // pred_check
    _
  $region3: #{_lambda_.3} parent=0 // pred_check_branch
    %11 = sbr.rel (0) target = $region5
  $region4: #{_lambda_.3} parent=0 // pred_region
    _
  $region5: #{_lambda_.3} parent=0 // pred_fallthru
    _
  // Predicated region
  $region6: #{_lambda_.3} parent=0 // pred_check
    _
  $region7: #{_lambda_.3} parent=0 // pred_check_branch
    %13 = sbr.rel (0) target = $region9
  $region8: #{_lambda_.3} parent=0 // pred_region
    _
  $region9: #{_lambda_.3} parent=0 // pred_fallthru
    _
  // Predicated region
  $region10: #{_lambda_.3} parent=0 // pred_check
    _
  $region11: #{_lambda_.3} parent=0 // pred_check_branch
    %15 = sbr.rel (0) target = $region13
  $region12: #{_lambda_.3} parent=0 // pred_region
    _
  $region13: #{_lambda_.3} parent=0 // pred_fallthru
    _
  // Predicated region
  $region14: #{_lambda_.3} parent=0 // pred_check
    _
  $region15: #{_lambda_.3} parent=0 // pred_check_branch
    %17 = sbr.rel (0) target = $region17
  $region16: #{_lambda_.3} parent=0 // pred_region
    _
  $region17: #{_lambda_.3} parent=0 // pred_fallthru
    _
  // Predicated region
  $region18: #{_lambda_.3} parent=0 // pred_check
    _
  $region19: #{_lambda_.3} parent=0 // pred_check_branch
    %19 = sbr.rel (0) target = $region21
  $region20: #{_lambda_.3} parent=0 // pred_region
    _
  $region21: #{_lambda_.3} parent=0 // pred_fallthru
    _
  %v21 = vld [vmem:[%s0] sm:$0x3]
  %v22 = vunpack.c.0.s8 %v21
  %v23 = vcvt.s32.f32 %v22
  %v24 = vld [vmem:[%s4] sm:$0xff]
  %v25 = vld [vmem:[%s2] sm:$0x1]
  %27 = vset.pattern.permute.xlu0 0
  %28 = vperm.xlu0 %27, %v24
  %v29 = vpop.permute.xlu0 %28
  %v31 = vlaneseq
  %v32 = vshrl.u32 %v31, 7
  %v33 = vsub.s32 0, %v32
  %v34 = vrot.slane %v25, %v33
  %v35 = vadd.f32 %v29, %v34
  %v36 = vmul.f32 %v35, 0.2
  %v37 = vmax.f32 %v35, %v36
  %v38 = vld [vmem:[%s3] sm:$0x1]
  %v40 = vlaneseq
  %v41 = vshrl.u32 %v40, 7
  %v42 = vsub.s32 0, %v41
  %v43 = vrot.slane %v38, %v42
  %v45 = vadd.f32 %v24, %v43
  %v46 = vmul.f32 %v45, 0.2
  %v47 = vmax.f32 %v45, %v46
  %49 = vset.pattern.permute.xlu0 0
  %50 = vperm.xlu0 %49, %v47
  %v51 = vpop.permute.xlu0 %50
  %v53 = vsub.f32 %v37, %v51
  %v54 = vmul.f32 %v53, 1.442695
  %v55 = vpow.pop %v54
  %v56 = vmul.f32 %v55, %v23
  %v57 = vpack.c.bf16 %v56, %v56
  %v58 = vld [vmem:[%s1] sm:$0xf]
  %vm59 = vcmask 64512
  %v61 = vsel %vm59, %v57, 0
  %vm63 = vcmask 1043456
  %v65 = vsel %vm63, %v58, 0
  %67 = vmatprep.subr.bf16.mxu0 0
  %68 = vmatpush1.bf16.msra.mxu0 %v65
  %69 = vmatprep.subr.bf16.mxu0 0
  %70 = vmatpush1.bf16.msra.mxu0 0
  %71 = vmatprep.subr.bf16.mxu0 0
  %72 = vmatpush1.bf16.msra.mxu0 0
  %73 = vmatprep.subr.bf16.mxu0 0
  %74 = vmatpush1.bf16.msra.mxu0 0
  %75 = vmatprep.subr.bf16.mxu0 0
  %76 = vmatpush1.bf16.msra.mxu0 0
  %77 = vmatprep.subr.bf16.mxu0 0
  %78 = vmatpush1.bf16.msra.mxu0 0
  %79 = vmatprep.subr.bf16.mxu0 0
  %80 = vmatpush1.bf16.msra.mxu0 0
  %81 = vmatprep.subr.bf16.mxu0 0
  %82 = vmatpush1.bf16.msra.mxu0 0
  %83 = vmatprep.subr.bf16.mxu0 0
  %84 = vmatpush1.bf16.msra.mxu0 0
  %85 = vmatprep.subr.bf16.mxu0 0
  %86 = vmatpush1.bf16.msra.mxu0 0
  %87 = vmatprep.subr.bf16.mxu0 0
  %88 = vmatpush1.bf16.msra.mxu0 0
  %89 = vmatprep.subr.bf16.mxu0 0
  %90 = vmatpush1.bf16.msra.mxu0 0
  %91 = vmatprep.subr.bf16.mxu0 0
  %92 = vmatpush1.bf16.msra.mxu0 0
  %93 = vmatprep.subr.bf16.mxu0 0
  %94 = vmatpush1.bf16.msra.mxu0 0
  %95 = vmatprep.subr.bf16.mxu0 0
  %96 = vmatpush1.bf16.msra.mxu0 0
  %97 = vmatprep.subr.bf16.mxu0 0
  %98 = vmatpush1.bf16.msra.mxu0 0
  %99 = vmatprep.mubr.bf16.mxu0 0
  %100 = vmatmul.mubr.bf16.gmra.mrb[0].mxu0 %v61
  %v101 = vpop.f32.mrb[0].mxu0
  %v102 = vadd.f32 0.0, %v101
  %v103 = vpop.f32.mrb[0].mxu0
  %v104 = vpop.f32.mrb[0].mxu0
  %v105 = vpop.f32.mrb[0].mxu0
  %106 = vdwg.mxu0
  %v107 = vmax.f32 %v102, 1e-30
  %109 = vset.pattern.permute.xlu0 8
  %110 = vperm.xlu0 %109, %v107
  %v111 = vpop.permute.xlu0 %110
  %v113 = vrcp.pop %v111
  %v114 = vmul.f32 %v102, %v113
  %v115 = vld [vmem:[%s2 + $0x1] sm:$0x1]
  %116 = vset.pattern.permute.xlu0 1
  %117 = vperm.xlu0 %116, %v24
  %v118 = vpop.permute.xlu0 %117
  %v120 = vlaneseq
  %v121 = vshrl.u32 %v120, 7
  %v122 = vsub.s32 0, %v121
  %v123 = vrot.slane %v115, %v122
  %v124 = vadd.f32 %v118, %v123
  %v125 = vmul.f32 %v124, 0.2
  %v126 = vmax.f32 %v124, %v125
  %127 = vset.pattern.permute.xlu0 1
  %128 = vperm.xlu0 %127, %v47
  %v129 = vpop.permute.xlu0 %128
  %v131 = vsub.f32 %v126, %v129
  %v132 = vmul.f32 %v131, 1.442695
  %v133 = vpow.pop %v132
  %v134 = vmul.f32 %v133, %v23
  %v135 = vpack.c.bf16 %v134, %v134
  %s136 = scalar_lea.vmem %s1, 4
  %v137 = vld [vmem:[%s136] sm:$0xf]
  %v139 = vsel %vm59, %v135, 0
  %v142 = vsel %vm63, %v137, 0
  %144 = vmatprep.subr.bf16.mxu0 0
  %145 = vmatpush1.bf16.msra.mxu0 %v142
  %146 = vmatprep.subr.bf16.mxu0 0
  %147 = vmatpush1.bf16.msra.mxu0 0
  %148 = vmatprep.subr.bf16.mxu0 0
  %149 = vmatpush1.bf16.msra.mxu0 0
  %150 = vmatprep.subr.bf16.mxu0 0
  %151 = vmatpush1.bf16.msra.mxu0 0
  %152 = vmatprep.subr.bf16.mxu0 0
  %153 = vmatpush1.bf16.msra.mxu0 0
  %154 = vmatprep.subr.bf16.mxu0 0
  %155 = vmatpush1.bf16.msra.mxu0 0
  %156 = vmatprep.subr.bf16.mxu0 0
  %157 = vmatpush1.bf16.msra.mxu0 0
  %158 = vmatprep.subr.bf16.mxu0 0
  %159 = vmatpush1.bf16.msra.mxu0 0
  %160 = vmatprep.subr.bf16.mxu0 0
  %161 = vmatpush1.bf16.msra.mxu0 0
  %162 = vmatprep.subr.bf16.mxu0 0
  %163 = vmatpush1.bf16.msra.mxu0 0
  %164 = vmatprep.subr.bf16.mxu0 0
  %165 = vmatpush1.bf16.msra.mxu0 0
  %166 = vmatprep.subr.bf16.mxu0 0
  %167 = vmatpush1.bf16.msra.mxu0 0
  %168 = vmatprep.subr.bf16.mxu0 0
  %169 = vmatpush1.bf16.msra.mxu0 0
  %170 = vmatprep.subr.bf16.mxu0 0
  %171 = vmatpush1.bf16.msra.mxu0 0
  %172 = vmatprep.subr.bf16.mxu0 0
  %173 = vmatpush1.bf16.msra.mxu0 0
  %174 = vmatprep.subr.bf16.mxu0 0
  %175 = vmatpush1.bf16.msra.mxu0 0
  %176 = vmatprep.mubr.bf16.mxu0 0
  %177 = vmatmul.mubr.bf16.gmra.mrb[0].mxu0 %v139
  %v178 = vpop.f32.mrb[0].mxu0
  %v179 = vadd.f32 0.0, %v178
  %v180 = vpop.f32.mrb[0].mxu0
  %v181 = vpop.f32.mrb[0].mxu0
  %v182 = vpop.f32.mrb[0].mxu0
  %183 = vdwg.mxu0
  %v184 = vmax.f32 %v179, 1e-30
  %186 = vset.pattern.permute.xlu0 8
  %187 = vperm.xlu0 %186, %v184
  %v188 = vpop.permute.xlu0 %187
  %v190 = vrcp.pop %v188
  %v191 = vmul.f32 %v179, %v190
  %193 = vrot.lane.b32.xlu0 %v191, 8
  %v194 = vpop.permute.xlu0 %193
  %v196 = vsel %vm59, %v114, %v194
  %197 = vrot.lane.b32.xlu0 %v24, 126
  %v198 = vpop.permute.xlu0 %197
  %v200 = vadd.f32 %v196, %v198
  %v201 = vmul.f32 %v200, 0.999995
  %v202 = vmax.f32 %v201, 0.0
  %vm203 = vcmask 130048
  %204 = vst.msk [vmem:[%s5] sm:$0xff] %vm203, %v202
  // Predicated region
  $region22: #{_lambda_.3} parent=0 // pred_check
    _
  $region23: #{_lambda_.3} parent=0 // pred_check_branch
    %206 = sbr.rel (0) target = $region25
  $region24: #{_lambda_.3} parent=0 // pred_region
    _
  $region25: #{_lambda_.3} parent=0 // pred_fallthru
    _
  // Predicated region
  $region26: #{_lambda_.3} parent=0 // pred_check
    _
  $region27: #{_lambda_.3} parent=0 // pred_check_branch
    %208 = sbr.rel (0) target = $region29
  $region28: #{_lambda_.3} parent=0 // pred_region
    _
  $region29: #{_lambda_.3} parent=0 // pred_fallthru
    _

</llo_original>
